<compile_context>
chip_gen: v6e
topology: v6e:2x2x1
jax: 0.10.0
libtpu: 0.0.40
codegen_flags: <defaults>
</compile_context>

<pallas_src>
import functools

import jax
import jax.numpy as jnp
from jax import lax
from jax.experimental import pallas as pl
from jax.experimental.pallas import tpu as pltpu

LN_EPS = 1e-5
_VMEM_BUDGET_BYTES = 24 * 1024 * 1024   # target for pipelined blocks + weights
_TARGET_ROWS_PER_STEP = 1024            # ~HBM-roofline-friendly tile height


def _merge_ln_proj_kernel(xe_ref, xo_ref, we_ref, wo_ref, b_ref, o_ref):
    """Fused 2x2-merge + LayerNorm(4C) + Linear(4C -> out).

    xe_ref: (th, W2, 2C)  even input rows -> channels [x0 | x2]
    xo_ref: (th, W2, 2C)  odd  input rows -> channels [x1 | x3]
    we_ref: (2C, out)     gamma-folded weight rows for [x0 | x2]
    wo_ref: (2C, out)     gamma-folded weight rows for [x1 | x3]
    b_ref : (1, out)      beta @ W^T
    o_ref : (th, W2, out)
    """
    th, w2, c2 = xe_ref.shape
    out_dim = o_ref.shape[-1]

    xe = xe_ref[...].astype(jnp.float32)
    xo = xo_ref[...].astype(jnp.float32)

    # LayerNorm stats over the concatenated 4C channels, single f32 pass
    # (biased variance, like torch.nn.LayerNorm).
    inv_n = 1.0 / (2 * c2)
    s = jnp.sum(xe, axis=-1, keepdims=True) + jnp.sum(xo, axis=-1, keepdims=True)
    ss = jnp.sum(xe * xe, axis=-1, keepdims=True) + jnp.sum(xo * xo, axis=-1, keepdims=True)
    mean = s * inv_n
    var = jnp.maximum(ss * inv_n - mean * mean, 0.0)
    rstd = lax.rsqrt(var + LN_EPS)

    xne = ((xe - mean) * rstd).astype(we_ref.dtype).reshape(th * w2, c2)
    xno = ((xo - mean) * rstd).astype(wo_ref.dtype).reshape(th * w2, c2)

    acc = jnp.dot(xne, we_ref[...], preferred_element_type=jnp.float32)
    acc = acc + jnp.dot(xno, wo_ref[...], preferred_element_type=jnp.float32)
    acc = acc + b_ref[...].astype(jnp.float32)
    o_ref[...] = acc.reshape(th, w2, out_dim).astype(o_ref.dtype)


@functools.partial(jax.jit, static_argnames=("block_rows",))
def patch_merging2d(x, gamma, beta, weight, block_rows=None):
    """PatchMerging2D forward (channel-last).

    x:      (B, H, W, C)
    gamma:  (4C,)          LayerNorm weight
    beta:   (4C,)          LayerNorm bias
    weight: (out_dim, 4C)  Linear weight (torch convention, bias=False)
    returns (B, ceil(H/2), ceil(W/2), out_dim)
    """
    B, H, W, C = x.shape
    out_dim = weight.shape[0]
    C4, C2 = 4 * C, 2 * C

    pad_h, pad_w = H % 2, W % 2
    if pad_h or pad_w:  # rare path; matches F.pad in the module
        x = jnp.pad(x, ((0, 0), (0, pad_h), (0, pad_w), (0, 0)))
    H2, W2 = (H + pad_h) // 2, (W + pad_w) // 2

    # Free row-major view: (B, 2*H2, 2*W2, C) -> (B*H2, 2, W2, 2C).
    # Along the last dim: even rows hold [x0 | x2], odd rows hold [x1 | x3].
    xr = x.reshape(B * H2, 2, W2, C2)
    BH2 = B * H2

    # Fold LayerNorm affine into the projection (one-time XLA op).
    w_t = weight.astype(jnp.float32).T * gamma.astype(jnp.float32)[:, None]  # (4C, out)
    w_even = jnp.concatenate([w_t[0:C], w_t[2 * C:3 * C]], axis=0)           # rows for [x0 | x2]
    w_odd = jnp.concatenate([w_t[C:2 * C], w_t[3 * C:4 * C]], axis=0)        # rows for [x1 | x3]
    b_eff = (beta.astype(jnp.float32) @ weight.astype(jnp.float32).T).reshape(1, out_dim)

    # bf16 activations -> bf16 MXU inputs; f32 stays f32 (accumulate in f32).
    w_dtype = jnp.bfloat16 if x.dtype == jnp.bfloat16 else jnp.float32
    w_even = w_even.astype(w_dtype)
    w_odd = w_odd.astype(w_dtype)

    # ---- tile-height selection from a VMEM budget (all sizes are static) ----
    in_bytes = jnp.dtype(x.dtype).itemsize
    w_bytes = jnp.dtype(w_dtype).itemsize
    weight_vmem = 2 * (C4 * out_dim * w_bytes + out_dim * 4)          # double-buffered consts
    per_row_vmem = 2 * C4 * in_bytes + 2 * out_dim * in_bytes          # dbl-buffered in + out
    per_th_vmem = W2 * per_row_vmem

    if block_rows is None:
        avail = max(_VMEM_BUDGET_BYTES - weight_vmem, per_th_vmem)
        th_budget = max(1, avail // per_th_vmem)
        th_target = max(1, (_TARGET_ROWS_PER_STEP + W2 - 1) // W2)
        th = int(min(th_budget, th_target, BH2))
    else:
        th = int(max(1, min(block_rows, BH2)))
    if th >= BH2 and BH2 > 1:
        th = (BH2 + 1) // 2        # keep >= 2 grid steps (v7x: 2 TensorCores)

    grid_len = (BH2 + th - 1) // th
    est_vmem = weight_vmem + per_th_vmem * th
    vmem_limit = int(min(max(32 * 1024 * 1024, est_vmem + (4 << 20)),
                         128 * 1024 * 1024))

    out = pl.pallas_call(
        _merge_ln_proj_kernel,
        out_shape=jax.ShapeDtypeStruct((BH2, W2, out_dim), x.dtype),
        grid=(grid_len,),
        in_specs=[
            pl.BlockSpec((th, None, W2, C2), lambda i: (i, 0, 0, 0)),  # even rows
            pl.BlockSpec((th, None, W2, C2), lambda i: (i, 1, 0, 0)),  # odd rows
            pl.BlockSpec((C2, out_dim), lambda i: (0, 0)),             # w_even
            pl.BlockSpec((C2, out_dim), lambda i: (0, 0)),             # w_odd
            pl.BlockSpec((1, out_dim), lambda i: (0, 0)),              # bias
        ],
        out_specs=pl.BlockSpec((th, W2, out_dim), lambda i: (i, 0, 0)),
        compiler_params=pltpu.CompilerParams(
            dimension_semantics=("parallel",),
            vmem_limit_bytes=vmem_limit,
        ),
    )(xr, xr, w_even, w_odd, b_eff)

    return out.reshape(B, H2, W2, out_dim)


# ----------------------------- pure-JAX reference -----------------------------
def _patch_merge_channel_last(x):
    B, H, W, C = x.shape
    pad_h, pad_w = H % 2, W % 2
    if pad_h or pad_w:
        x = jnp.pad(x, ((0, 0), (0, pad_h), (0, pad_w), (0, 0)))
    x0 = x[:, 0::2, 0::2, :]
    x1 = x[:, 1::2, 0::2, :]
    x2 = x[:, 0::2, 1::2, :]
    x3 = x[:, 1::2, 1::2, :]
    return jnp.concatenate([x0, x1, x2, x3], axis=-1)


def _reference(x, gamma, beta, weight):
    xm = _patch_merge_channel_last(x).astype(jnp.float32)
    mean = jnp.mean(xm, axis=-1, keepdims=True)
    var = jnp.mean((xm - mean) ** 2, axis=-1, keepdims=True)
    xn = (xm - mean) / jnp.sqrt(var + LN_EPS)
    y = xn * gamma.astype(jnp.float32) + beta.astype(jnp.float32)
    return jnp.einsum("bhwc,oc->bhwo", y, weight.astype(jnp.float32))


if __name__ == "__main__":
    key = jax.random.PRNGKey(0)
    k1, k2, k3, k4, k5 = jax.random.split(key, 5)

    # PatchMerging2D(dim=4): norm = LayerNorm(16), reduction = Linear(16, 8, bias=False)
    B, H, W, dim = 2, 16, 16, 4
    out_dim = 2 * dim

    x = jax.random.normal(k1, (B, H, W, dim), dtype=jnp.float32)
    gamma = 1.0 + 0.1 * jax.random.normal(k2, (4 * dim,), dtype=jnp.float32)
    beta = 0.1 * jax.random.normal(k3, (4 * dim,), dtype=jnp.float32)
    bound = 1.0 / (4 * dim) ** 0.5
    weight = jax.random.uniform(
        k4, (out_dim, 4 * dim), minval=-bound, maxval=bound, dtype=jnp.float32
    )

    out = jax.block_until_ready(patch_merging2d(x, gamma, beta, weight))
    ref = _reference(x, gamma, beta, weight)
    assert out.shape == (B, H // 2, W // 2, out_dim), out.shape
    assert jnp.allclose(out, ref, atol=1e-4, rtol=1e-4), float(jnp.max(jnp.abs(out - ref)))

    # Odd H/W: exercises the pad path and the masked partial last grid block.
    x2 = jax.random.normal(k5, (1, 17, 15, dim), dtype=jnp.float32)
    out2 = jax.block_until_ready(patch_merging2d(x2, gamma, beta, weight))
    ref2 = _reference(x2, gamma, beta, weight)
    assert out2.shape == (1, 9, 8, out_dim), out2.shape
    assert jnp.allclose(out2, ref2, atol=1e-4, rtol=1e-4), float(jnp.max(jnp.abs(out2 - ref2)))

    print("KERNEL_OK")
</pallas_src>

<mosaic_0001>
module attributes {stable_mosaic.version = 11 : i64} {
  func.func @_merge_ln_proj_kernel(%arg0: i32, %arg1: memref<8x1x8x8xf32, #tpu.memory_space<vmem>>, %arg2: memref<8x1x8x8xf32, #tpu.memory_space<vmem>>, %arg3: memref<8x8xf32, #tpu.memory_space<vmem>>, %arg4: memref<8x8xf32, #tpu.memory_space<vmem>>, %arg5: memref<1x8xf32, #tpu.memory_space<vmem>>, %arg6: memref<8x8x8xf32, #tpu.memory_space<vmem>>) attributes {dimension_semantics = [#tpu.dimension_semantics<parallel>], iteration_bounds = array<i64: 2>, scalar_prefetch = 0 : i64, scratch_operands = 0 : i64, tpu.core_type = #tpu.core_type<tc>, window_params = [{transform_indices = @transform_0, window_bounds = array<i64: 8, 1, 8, 8>}, {transform_indices = @transform_1, window_bounds = array<i64: 8, 1, 8, 8>}, {pipeline_mode = #tpu.pipeline_mode<synchronous>, transform_indices = @transform_2, window_bounds = array<i64: 8, 8>}, {pipeline_mode = #tpu.pipeline_mode<synchronous>, transform_indices = @transform_3, window_bounds = array<i64: 8, 8>}, {pipeline_mode = #tpu.pipeline_mode<synchronous>, transform_indices = @transform_4, window_bounds = array<i64: 1, 8>}, {transform_indices = @transform_5, window_bounds = array<i64: 8, 8, 8>}]} {
    %c0 = arith.constant 0 : index
    %c0_0 = arith.constant 0 : index
    %c0_1 = arith.constant 0 : index
    %c0_2 = arith.constant 0 : index
    %0 = vector.load %arg1[%c0, %c0_0, %c0_1, %c0_2] : memref<8x1x8x8xf32, #tpu.memory_space<vmem>>, vector<8x1x8x8xf32>
    %1 = vector.shape_cast %0 : vector<8x1x8x8xf32> to vector<8x8x8xf32>
    %c0_3 = arith.constant 0 : index
    %c0_4 = arith.constant 0 : index
    %c0_5 = arith.constant 0 : index
    %c0_6 = arith.constant 0 : index
    %2 = vector.load %arg2[%c0_3, %c0_4, %c0_5, %c0_6] : memref<8x1x8x8xf32, #tpu.memory_space<vmem>>, vector<8x1x8x8xf32>
    %3 = vector.shape_cast %2 : vector<8x1x8x8xf32> to vector<8x8x8xf32>
    %cst = arith.constant dense<0.000000e+00> : vector<8x8xf32>
    %4 = vector.multi_reduction <add>, %1, %cst [2] : vector<8x8x8xf32> to vector<8x8xf32>
    %5 = vector.shape_cast %4 : vector<8x8xf32> to vector<8x8x1xf32>
    %cst_7 = arith.constant dense<0.000000e+00> : vector<8x8xf32>
    %6 = vector.multi_reduction <add>, %3, %cst_7 [2] : vector<8x8x8xf32> to vector<8x8xf32>
    %7 = vector.shape_cast %6 : vector<8x8xf32> to vector<8x8x1xf32>
    %8 = arith.addf %5, %7 : vector<8x8x1xf32>
    %9 = arith.mulf %1, %1 : vector<8x8x8xf32>
    %cst_8 = arith.constant dense<0.000000e+00> : vector<8x8xf32>
    %10 = vector.multi_reduction <add>, %9, %cst_8 [2] : vector<8x8x8xf32> to vector<8x8xf32>
    %11 = vector.shape_cast %10 : vector<8x8xf32> to vector<8x8x1xf32>
    %12 = arith.mulf %3, %3 : vector<8x8x8xf32>
    %cst_9 = arith.constant dense<0.000000e+00> : vector<8x8xf32>
    %13 = vector.multi_reduction <add>, %12, %cst_9 [2] : vector<8x8x8xf32> to vector<8x8xf32>
    %14 = vector.shape_cast %13 : vector<8x8xf32> to vector<8x8x1xf32>
    %15 = arith.addf %11, %14 : vector<8x8x1xf32>
    %cst_10 = arith.constant 6.250000e-02 : f32
    %16 = vector.broadcast %cst_10 : f32 to vector<8x8x1xf32>
    %17 = arith.mulf %8, %16 : vector<8x8x1xf32>
    %cst_11 = arith.constant 6.250000e-02 : f32
    %18 = vector.broadcast %cst_11 : f32 to vector<8x8x1xf32>
    %19 = arith.mulf %15, %18 : vector<8x8x1xf32>
    %20 = arith.mulf %17, %17 : vector<8x8x1xf32>
    %21 = arith.subf %19, %20 : vector<8x8x1xf32>
    %cst_12 = arith.constant 0.000000e+00 : f32
    %22 = vector.broadcast %cst_12 : f32 to vector<8x8x1xf32>
    %23 = arith.maximumf %21, %22 : vector<8x8x1xf32>
    %cst_13 = arith.constant 9.99999974E-6 : f32
    %24 = vector.broadcast %cst_13 : f32 to vector<8x8x1xf32>
    %25 = arith.addf %23, %24 : vector<8x8x1xf32>
    %26 = math.rsqrt %25 : vector<8x8x1xf32>
    %27 = vector.broadcast %17 : vector<8x8x1xf32> to vector<8x8x8xf32>
    %28 = arith.subf %1, %27 : vector<8x8x8xf32>
    %29 = vector.broadcast %26 : vector<8x8x1xf32> to vector<8x8x8xf32>
    %30 = arith.mulf %28, %29 : vector<8x8x8xf32>
    %31 = vector.shape_cast %30 : vector<8x8x8xf32> to vector<64x8xf32>
    %32 = vector.broadcast %17 : vector<8x8x1xf32> to vector<8x8x8xf32>
    %33 = arith.subf %3, %32 : vector<8x8x8xf32>
    %34 = vector.broadcast %26 : vector<8x8x1xf32> to vector<8x8x8xf32>
    %35 = arith.mulf %33, %34 : vector<8x8x8xf32>
    %36 = vector.shape_cast %35 : vector<8x8x8xf32> to vector<64x8xf32>
    %c0_14 = arith.constant 0 : index
    %c0_15 = arith.constant 0 : index
    %37 = vector.load %arg3[%c0_14, %c0_15] : memref<8x8xf32, #tpu.memory_space<vmem>>, vector<8x8xf32>
    %cst_16 = arith.constant dense<0.000000e+00> : vector<64x8xf32>
    %38 = tpu.matmul %31, %37, %cst_16 {dimension_numbers = #tpu.dot_dimension_numbers<[1], [0], [0], [1], [0, 0, 1, 1], [], []>} : vector<64x8xf32>, vector<8x8xf32>, vector<64x8xf32> -> vector<64x8xf32>
    %c0_17 = arith.constant 0 : index
    %c0_18 = arith.constant 0 : index
    %39 = vector.load %arg4[%c0_17, %c0_18] : memref<8x8xf32, #tpu.memory_space<vmem>>, vector<8x8xf32>
    %cst_19 = arith.constant dense<0.000000e+00> : vector<64x8xf32>
    %40 = tpu.matmul %36, %39, %cst_19 {dimension_numbers = #tpu.dot_dimension_numbers<[1], [0], [0], [1], [0, 0, 1, 1], [], []>} : vector<64x8xf32>, vector<8x8xf32>, vector<64x8xf32> -> vector<64x8xf32>
    %41 = arith.addf %38, %40 : vector<64x8xf32>
    %c0_20 = arith.constant 0 : index
    %c0_21 = arith.constant 0 : index
    %42 = vector.load %arg5[%c0_20, %c0_21] : memref<1x8xf32, #tpu.memory_space<vmem>>, vector<1x8xf32>
    %43 = vector.broadcast %42 : vector<1x8xf32> to vector<64x8xf32>
    %44 = arith.addf %41, %43 : vector<64x8xf32>
    %45 = vector.shape_cast %44 : vector<64x8xf32> to vector<8x8x8xf32>
    %c0_22 = arith.constant 0 : index
    %c0_23 = arith.constant 0 : index
    %c0_24 = arith.constant 0 : index
    %46 = vector.load %arg6[%c0_22, %c0_23, %c0_24] : memref<8x8x8xf32, #tpu.memory_space<vmem>>, vector<8x8x8xf32>
    tpu.vector_store %arg6[%c0_22, %c0_23, %c0_24], %45 {strides = array<i32>} : memref<8x8x8xf32, #tpu.memory_space<vmem>>, vector<8x8x8xf32>,
    return
  }
  func.func @transform_0(%arg0: i32) -> (i32, i32, i32, i32) {
    %c0_i32 = arith.constant 0 : i32
    %c0_i32_0 = arith.constant 0 : i32
    %c0_i32_1 = arith.constant 0 : i32
    %c0_i32_2 = arith.constant 0 : i32
    return %arg0, %c0_i32, %c0_i32_0, %c0_i32_1 : i32, i32, i32, i32
  }
  func.func @transform_1(%arg0: i32) -> (i32, i32, i32, i32) {
    %c1_i32 = arith.constant 1 : i32
    %c0_i32 = arith.constant 0 : i32
    %c0_i32_0 = arith.constant 0 : i32
    %c0_i32_1 = arith.constant 0 : i32
    return %arg0, %c1_i32, %c0_i32, %c0_i32_0 : i32, i32, i32, i32
  }
  func.func @transform_2(%arg0: i32) -> (i32, i32) {
    %c0_i32 = arith.constant 0 : i32
    %c0_i32_0 = arith.constant 0 : i32
    %c0_i32_1 = arith.constant 0 : i32
    return %c0_i32, %c0_i32_0 : i32, i32
  }
  func.func @transform_3(%arg0: i32) -> (i32, i32) {
    %c0_i32 = arith.constant 0 : i32
    %c0_i32_0 = arith.constant 0 : i32
    %c0_i32_1 = arith.constant 0 : i32
    return %c0_i32, %c0_i32_0 : i32, i32
  }
  func.func @transform_4(%arg0: i32) -> (i32, i32) {
    %c0_i32 = arith.constant 0 : i32
    %c0_i32_0 = arith.constant 0 : i32
    %c0_i32_1 = arith.constant 0 : i32
    return %c0_i32, %c0_i32_0 : i32, i32
  }
  func.func @transform_5(%arg0: i32) -> (i32, i32, i32) {
    %c0_i32 = arith.constant 0 : i32
    %c0_i32_0 = arith.constant 0 : i32
    %c0_i32_1 = arith.constant 0 : i32
    return %arg0, %c0_i32, %c0_i32_0 : i32, i32, i32
  }
}

</mosaic_0001>

<llo_original>
// kernel: patch_merging2d.1
$region0: #{patch_merging2d.1}
  #allocation0 [shape = 'u32[]', space=smem, size = 0x4, offset = 0x4, fixed_abs, tag = 'smem constant byte address 0x4 - core index']
  #allocation1 [shape = 'u32[144,128]{1,0:T(1,128)}', space=vmem, size = 0x12000, scoped, tag = 'internal scratch']
  %s0 = inlined_call_operand.vmem [shape: f32[16,2,8,8], index: 0, kind: input, shape index: {}, may-alias: {0,1}]
  %s1 = inlined_call_operand.vmem [shape: f32[16,2,8,8], index: 1, kind: input, shape index: {}, may-alias: {0,1}]
  %s2 = inlined_call_operand.vmem [shape: f32[8,8], index: 2, kind: input, shape index: {}]
  %s3 = inlined_call_operand.vmem [shape: f32[8,8], index: 3, kind: input, shape index: {}]
  %s4 = inlined_call_operand.vmem [shape: f32[1,8], index: 4, kind: input, shape index: {}]
  %s5 = inlined_call_operand.hbm [shape: f32[16,8,8], index: 5, kind: output, shape index: {}]
  %s6 = sld [smem:[#allocation0]]
  $region129: #{patch_merging2d.1} parent=0
    _
  %s8 = ssub.s32 1, %s6
  %s9 = scalar_select 0, %s8, %s6
  $region1: #{patch_merging2d.1} parent=0
    #allocation2 [shape = 'u8[65536]{0}', space=vmem, size = 0x10000, scoped, tag = 'input window, operand 0']
    #allocation3 [shape = 'u8[65536]{0}', space=vmem, size = 0x10000, scoped, tag = 'input window, operand 1']
    #allocation4 [shape = 'u8[65536]{0}', space=vmem, size = 0x10000, scoped, tag = 'output window, operand 0']
    #allocation5 [shape = 's32[2]{0}', space=sflag, size = 0x8, scoped, tag = 'scoped memory for patch_merging2d.1']
    %10 = vsyncpa [#allocation5], 0
    %s11 = scalar_lea.sflag [#allocation5], 1
    %12 = vsyncpa %s11, 0
    loop: start=0, step=1, limit=4
    $region2: #{patch_merging2d.1} parent=1 // loop_pre_header
      _
    $region3: #{patch_merging2d.1} parent=1 // loop_header
      %s14 = sphi 0, %s18
      %p15 = scmp.ge.s32.totalorder %s14, 4
      %s24 = sphi 0, %s26
      %s27 = sphi 0, %s24
      %s28 = sphi 0, %s27
      %s44 = sphi 0, %s28
      %s50 = sphi 0, %s52
      %s53 = sphi 0, %s50
      %s54 = sphi 0, %s53
      %s70 = sphi 0, %s54
      %s74 = sphi 0, %s74
      %s76 = sphi 0, %s74
      %s77 = sphi 0, %s76
      %s91 = sphi 0, %s77
      %s95 = sphi 0, %s95
      %s97 = sphi 0, %s95
      %s98 = sphi 0, %s97
      %s112 = sphi 0, %s98
      %s116 = sphi 0, %s116
      %s118 = sphi 0, %s116
      %s119 = sphi 0, %s118
      %s133 = sphi 0, %s119
      %s139 = sphi 0, %s141
      %s142 = sphi 0, %s139
      %s143 = sphi 0, %s142
      %s159 = sphi 0, %s143
    $region4: #{patch_merging2d.1} parent=1 // loop_header_branch
      %17 = sbr.rel (%p15) target = $region8
    $region5: #{patch_merging2d.1} parent=1 // loop_body
      %s19 = ssub.s32 %s14, 1
      %s20 = ssub.s32 %s14, 2
      %s21 = sadd.s32 %s14, 1
      %s22 = ssub.s32 %s14, %s21
      %p23 = scmp.eq.s32.totalorder %s22, 0
      %s25 = sadd.s32 %s24, 1
      %s26 = scalar_select %p23, %s24, %s25
      %p29 = pneg %p23
      %p30 = scmp.eq.s32.totalorder %s14, 1
      %p31 = por %p29, %p30
      %p32 = scmp.ne.s32.totalorder %s24, %s27
      %p33 = scmp.eq.s32.totalorder %s14, 0
      %p34 = por %p32, %p33
      %p35 = scmp.ne.s32.totalorder %s24, %s27
      %p36 = scmp.eq.s32.totalorder %s19, 1
      %p37 = por %p35, %p36
      %p38 = scmp.ne.s32.totalorder %s27, %s28
      %p39 = scmp.eq.s32.totalorder %s19, 0
      %p40 = por %p38, %p39
      %p41 = scmp.ne.s32.totalorder %s27, %s28
      %p42 = scmp.eq.s32.totalorder %s20, 1
      %p43 = por %p41, %p42
      %p45 = scmp.ne.s32.totalorder %s28, %s44
      %p46 = scmp.eq.s32.totalorder %s20, 0
      %p47 = por %p45, %p46
      %s48 = ssub.s32 %s14, %s21
      %p49 = scmp.eq.s32.totalorder %s48, 0
      %s51 = sadd.s32 %s50, 1
      %s52 = scalar_select %p49, %s50, %s51
      %p55 = pneg %p49
      %p56 = scmp.eq.s32.totalorder %s14, 1
      %p57 = por %p55, %p56
      %p58 = scmp.ne.s32.totalorder %s50, %s53
      %p59 = scmp.eq.s32.totalorder %s14, 0
      %p60 = por %p58, %p59
      %p61 = scmp.ne.s32.totalorder %s50, %s53
      %p62 = scmp.eq.s32.totalorder %s19, 1
      %p63 = por %p61, %p62
      %p64 = scmp.ne.s32.totalorder %s53, %s54
      %p65 = scmp.eq.s32.totalorder %s19, 0
      %p66 = por %p64, %p65
      %p67 = scmp.ne.s32.totalorder %s53, %s54
      %p68 = scmp.eq.s32.totalorder %s20, 1
      %p69 = por %p67, %p68
      %p71 = scmp.ne.s32.totalorder %s54, %s70
      %p72 = scmp.eq.s32.totalorder %s20, 0
      %p73 = por %p71, %p72
      %s75 = sadd.s32 %s74, 1
      %p78 = scmp.eq.s32.totalorder %s14, 1
      %p79 = scmp.ne.s32.totalorder %s74, %s76
      %p80 = scmp.eq.s32.totalorder %s14, 0
      %p81 = por %p79, %p80
      %p82 = scmp.ne.s32.totalorder %s74, %s76
      %p83 = scmp.eq.s32.totalorder %s19, 1
      %p84 = por %p82, %p83
      %p85 = scmp.ne.s32.totalorder %s76, %s77
      %p86 = scmp.eq.s32.totalorder %s19, 0
      %p87 = por %p85, %p86
      %p88 = scmp.ne.s32.totalorder %s76, %s77
      %p89 = scmp.eq.s32.totalorder %s20, 1
      %p90 = por %p88, %p89
      %p92 = scmp.ne.s32.totalorder %s77, %s91
      %p93 = scmp.eq.s32.totalorder %s20, 0
      %p94 = por %p92, %p93
      %s96 = sadd.s32 %s95, 1
      %p99 = scmp.eq.s32.totalorder %s14, 1
      %p100 = scmp.ne.s32.totalorder %s95, %s97
      %p101 = scmp.eq.s32.totalorder %s14, 0
      %p102 = por %p100, %p101
      %p103 = scmp.ne.s32.totalorder %s95, %s97
      %p104 = scmp.eq.s32.totalorder %s19, 1
      %p105 = por %p103, %p104
      %p106 = scmp.ne.s32.totalorder %s97, %s98
      %p107 = scmp.eq.s32.totalorder %s19, 0
      %p108 = por %p106, %p107
      %p109 = scmp.ne.s32.totalorder %s97, %s98
      %p110 = scmp.eq.s32.totalorder %s20, 1
      %p111 = por %p109, %p110
      %p113 = scmp.ne.s32.totalorder %s98, %s112
      %p114 = scmp.eq.s32.totalorder %s20, 0
      %p115 = por %p113, %p114
      %s117 = sadd.s32 %s116, 1
      %p120 = scmp.eq.s32.totalorder %s14, 1
      %p121 = scmp.ne.s32.totalorder %s116, %s118
      %p122 = scmp.eq.s32.totalorder %s14, 0
      %p123 = por %p121, %p122
      %p124 = scmp.ne.s32.totalorder %s116, %s118
      %p125 = scmp.eq.s32.totalorder %s19, 1
      %p126 = por %p124, %p125
      %p127 = scmp.ne.s32.totalorder %s118, %s119
      %p128 = scmp.eq.s32.totalorder %s19, 0
      %p129 = por %p127, %p128
      %p130 = scmp.ne.s32.totalorder %s118, %s119
      %p131 = scmp.eq.s32.totalorder %s20, 1
      %p132 = por %p130, %p131
      %p134 = scmp.ne.s32.totalorder %s119, %s133
      %p135 = scmp.eq.s32.totalorder %s20, 0
      %p136 = por %p134, %p135
      %s137 = ssub.s32 %s14, %s21
      %p138 = scmp.eq.s32.totalorder %s137, 0
      %s140 = sadd.s32 %s139, 1
      %s141 = scalar_select %p138, %s139, %s140
      %p144 = pneg %p138
      %p145 = scmp.eq.s32.totalorder %s14, 1
      %p146 = por %p144, %p145
      %p147 = scmp.ne.s32.totalorder %s139, %s142
      %p148 = scmp.eq.s32.totalorder %s14, 0
      %p149 = por %p147, %p148
      %p150 = scmp.ne.s32.totalorder %s139, %s142
      %p151 = scmp.eq.s32.totalorder %s19, 1
      %p152 = por %p150, %p151
      %p153 = scmp.ne.s32.totalorder %s142, %s143
      %p154 = scmp.eq.s32.totalorder %s19, 0
      %p155 = por %p153, %p154
      %p156 = scmp.ne.s32.totalorder %s142, %s143
      %p157 = scmp.eq.s32.totalorder %s20, 1
      %p158 = por %p156, %p157
      %p160 = scmp.ne.s32.totalorder %s143, %s159
      %p161 = scmp.eq.s32.totalorder %s20, 0
      %p162 = por %p160, %p161
      %p163 = scmp.le.s32.totalorder 1, %s14
      %p164 = scmp.lt.s32.totalorder %s14, 3
      %p165 = pnand %p163, %p164
      %p166 = pneg %p165
      // Predicated region
      $region9: #{patch_merging2d.1} parent=5 // pred_check
        _
      $region10: #{patch_merging2d.1} parent=5 // pred_check_branch
        %168 = sbr.rel (%p165) target = $region12
      $region11: #{patch_merging2d.1} parent=5 // pred_region
        %s169 = ssub.s32 %s14, 1
        // Predicated region
        $region13: #{patch_merging2d.1} parent=11 // pred_check
          %p170 = pneg %p87
        $region14: #{patch_merging2d.1} parent=11 // pred_check_branch
          %172 = sbr.rel (%p170) target = $region16
        $region15: #{patch_merging2d.1} parent=11 // pred_region
          _
        $region16: #{patch_merging2d.1} parent=11 // pred_fallthru
          _
        // Predicated region
        $region17: #{patch_merging2d.1} parent=11 // pred_check
          %p173 = pneg %p108
        $region18: #{patch_merging2d.1} parent=11 // pred_check_branch
          %175 = sbr.rel (%p173) target = $region20
        $region19: #{patch_merging2d.1} parent=11 // pred_region
          _
        $region20: #{patch_merging2d.1} parent=11 // pred_fallthru
          _
        // Predicated region
        $region21: #{patch_merging2d.1} parent=11 // pred_check
          %p176 = pneg %p129
        $region22: #{patch_merging2d.1} parent=11 // pred_check_branch
          %178 = sbr.rel (%p176) target = $region24
        $region23: #{patch_merging2d.1} parent=11 // pred_region
          _
        $region24: #{patch_merging2d.1} parent=11 // pred_fallthru
          _
      $region12: #{patch_merging2d.1} parent=5 // pred_fallthru
        _
      %p179 = scmp.lt.s32.totalorder %s14, 2
      // Predicated region
      $region25: #{patch_merging2d.1} parent=5 // pred_check
        %p180 = pneg %p179
      $region26: #{patch_merging2d.1} parent=5 // pred_check_branch
        %182 = sbr.rel (%p180) target = $region28
      $region27: #{patch_merging2d.1} parent=5 // pred_region
        // Predicated region
        $region29: #{patch_merging2d.1} parent=27 // pred_check
          %p183 = pneg %p34
        $region30: #{patch_merging2d.1} parent=27 // pred_check_branch
          %185 = sbr.rel (%p183) target = $region32
        $region31: #{patch_merging2d.1} parent=27 // pred_region
          %s186 = sand.u32 %s24, 1
          %s187 = sand.u32 %s24, 1
          %s188 = smul.addr %s187, 64
          %s189 = scalar_lea.vmem [#allocation2], %s188
          %s190 = smul.u32 8, %s14
          %s191 = smul.addr %s190, 2
          %s192 = smul.addr %s191, 8
          %s193 = scalar_lea.vmem %s0, %s192
          // Predicated region
          $region33: #{patch_merging2d.1} parent=31 // pred_check
            _
          $region34: #{patch_merging2d.1} parent=31 // pred_check_branch
            %195 = sbr.rel (0) target = $region36
          $region35: #{patch_merging2d.1} parent=31 // pred_region
            // Predicated region
            $region37: #{patch_merging2d.1} parent=35 // pred_check
              _
            $region38: #{patch_merging2d.1} parent=35 // pred_check_branch
              %197 = sbr.rel (0) target = $region40
            $region39: #{patch_merging2d.1} parent=35 // pred_region
              // Predicated region
              $region52: #{patch_merging2d.1} parent=39 // pred_check
                _
              $region53: #{patch_merging2d.1} parent=39 // pred_check_branch
                %227 = sbr.rel (0) target = $region55
              $region54: #{patch_merging2d.1} parent=39 // pred_region
                loop: start=0, step=1, limit=1
                $region56: #{patch_merging2d.1} parent=54 // loop_pre_header
                  _
                $region57: #{patch_merging2d.1} parent=54 // loop_header
                  %s229 = sphi 0, %s233
                  %p230 = scmp.ge.s32.totalorder %s229, 1
                  %s234 = sphi %s193, %s193
                  %s235 = sphi %s189, %s189
                $region58: #{patch_merging2d.1} parent=54 // loop_header_branch
                  %232 = sbr.rel (%p230) target = $region62
                $region59: #{patch_merging2d.1} parent=54 // loop_body
                  %v236 = vld [vmem:[%s234] sm:$0xff]
                  %237 = vst [vmem:[%s235] sm:$0xff] %v236
                  %v238 = vld [vmem:[%s234 + $0x10] sm:$0xff]
                  %239 = vst [vmem:[%s235 + $0x8] sm:$0xff] %v238
                  %v240 = vld [vmem:[%s234 + $0x20] sm:$0xff]
                  %241 = vst [vmem:[%s235 + $0x10] sm:$0xff] %v240
                  %v242 = vld [vmem:[%s234 + $0x30] sm:$0xff]
                  %243 = vst [vmem:[%s235 + $0x18] sm:$0xff] %v242
                  %v244 = vld [vmem:[%s234 + $0x40] sm:$0xff]
                  %245 = vst [vmem:[%s235 + $0x20] sm:$0xff] %v244
                  %v246 = vld [vmem:[%s234 + $0x50] sm:$0xff]
                  %247 = vst [vmem:[%s235 + $0x28] sm:$0xff] %v246
                  %v248 = vld [vmem:[%s234 + $0x60] sm:$0xff]
                  %249 = vst [vmem:[%s235 + $0x30] sm:$0xff] %v248
                  %v250 = vld [vmem:[%s234 + $0x70] sm:$0xff]
                  %251 = vst [vmem:[%s235 + $0x38] sm:$0xff] %v250
                $region60: #{patch_merging2d.1} parent=54 // loop_footer
                  %s233 = sadd.s32 1, %s229
                $region61: #{patch_merging2d.1} parent=54 // loop_footer_branch
                  %228 = sbr.rel target = $region57
                $region62: #{patch_merging2d.1} parent=54 // loop_exit
                  _
              $region55: #{patch_merging2d.1} parent=39 // pred_fallthru
                _
              // Predicated region
              $region63: #{patch_merging2d.1} parent=39 // pred_check
                _
              $region64: #{patch_merging2d.1} parent=39 // pred_check_branch
                %253 = sbr.rel target = $region66
              $region65: #{patch_merging2d.1} parent=39 // pred_region
                _
              $region66: #{patch_merging2d.1} parent=39 // pred_fallthru
                _
            $region40: #{patch_merging2d.1} parent=35 // pred_fallthru
              _
            // Predicated region
            $region41: #{patch_merging2d.1} parent=35 // pred_check
              _
            $region42: #{patch_merging2d.1} parent=35 // pred_check_branch
              %199 = sbr.rel target = $region44
            $region43: #{patch_merging2d.1} parent=35 // pred_region
              %s201 = ssub.s32 256, 1
              loop: start=0, step=1, limit=1
              $region45: #{patch_merging2d.1} parent=43 // loop_pre_header
                _
              $region46: #{patch_merging2d.1} parent=43 // loop_header
                %s203 = sphi 0, %s207
                %p204 = scmp.ge.s32.totalorder %s203, 1
                %s208 = sphi %s193, %s193
                %s209 = sphi %s189, %s189
              $region47: #{patch_merging2d.1} parent=43 // loop_header_branch
                %206 = sbr.rel (%p204) target = $region51
              $region48: #{patch_merging2d.1} parent=43 // loop_body
                %v210 = vld [vmem:[%s208] sm:%s201]
                %211 = vst [vmem:[%s209] sm:%s201] %v210
                %v212 = vld [vmem:[%s208 + $0x10] sm:%s201]
                %213 = vst [vmem:[%s209 + $0x8] sm:%s201] %v212
                %v214 = vld [vmem:[%s208 + $0x20] sm:%s201]
                %215 = vst [vmem:[%s209 + $0x10] sm:%s201] %v214
                %v216 = vld [vmem:[%s208 + $0x30] sm:%s201]
                %217 = vst [vmem:[%s209 + $0x18] sm:%s201] %v216
                %v218 = vld [vmem:[%s208 + $0x40] sm:%s201]
                %219 = vst [vmem:[%s209 + $0x20] sm:%s201] %v218
                %v220 = vld [vmem:[%s208 + $0x50] sm:%s201]
                %221 = vst [vmem:[%s209 + $0x28] sm:%s201] %v220
                %v222 = vld [vmem:[%s208 + $0x60] sm:%s201]
                %223 = vst [vmem:[%s209 + $0x30] sm:%s201] %v222
                %v224 = vld [vmem:[%s208 + $0x70] sm:%s201]
                %225 = vst [vmem:[%s209 + $0x38] sm:%s201] %v224
              $region49: #{patch_merging2d.1} parent=43 // loop_footer
                %s207 = sadd.s32 1, %s203
              $region50: #{patch_merging2d.1} parent=43 // loop_footer_branch
                %202 = sbr.rel target = $region46
              $region51: #{patch_merging2d.1} parent=43 // loop_exit
                _
            $region44: #{patch_merging2d.1} parent=35 // pred_fallthru
              _
          $region36: #{patch_merging2d.1} parent=31 // pred_fallthru
            _
          %254 = vnop
        $region32: #{patch_merging2d.1} parent=27 // pred_fallthru
          _
        // Predicated region
        $region67: #{patch_merging2d.1} parent=27 // pred_check
          %p255 = pneg %p60
        $region68: #{patch_merging2d.1} parent=27 // pred_check_branch
          %257 = sbr.rel (%p255) target = $region70
        $region69: #{patch_merging2d.1} parent=27 // pred_region
          %s258 = sand.u32 %s50, 1
          %s259 = sand.u32 %s50, 1
          %s260 = smul.addr %s259, 64
          %s261 = scalar_lea.vmem [#allocation3], %s260
          %s262 = smul.u32 8, %s14
          %s263 = smul.addr %s262, 2
          %s264 = sadd.s32 1, %s263
          %s265 = smul.addr %s264, 8
          %s266 = scalar_lea.vmem %s1, %s265
          // Predicated region
          $region71: #{patch_merging2d.1} parent=69 // pred_check
            _
          $region72: #{patch_merging2d.1} parent=69 // pred_check_branch
            %268 = sbr.rel (0) target = $region74
          $region73: #{patch_merging2d.1} parent=69 // pred_region
            // Predicated region
            $region75: #{patch_merging2d.1} parent=73 // pred_check
              _
            $region76: #{patch_merging2d.1} parent=73 // pred_check_branch
              %270 = sbr.rel (0) target = $region78
            $region77: #{patch_merging2d.1} parent=73 // pred_region
              // Predicated region
              $region90: #{patch_merging2d.1} parent=77 // pred_check
                _
              $region91: #{patch_merging2d.1} parent=77 // pred_check_branch
                %300 = sbr.rel (0) target = $region93
              $region92: #{patch_merging2d.1} parent=77 // pred_region
                loop: start=0, step=1, limit=1
                $region94: #{patch_merging2d.1} parent=92 // loop_pre_header
                  _
                $region95: #{patch_merging2d.1} parent=92 // loop_header
                  %s302 = sphi 0, %s306
                  %p303 = scmp.ge.s32.totalorder %s302, 1
                  %s307 = sphi %s266, %s266
                  %s308 = sphi %s261, %s261
                $region96: #{patch_merging2d.1} parent=92 // loop_header_branch
                  %305 = sbr.rel (%p303) target = $region100
                $region97: #{patch_merging2d.1} parent=92 // loop_body
                  %v309 = vld [vmem:[%s307] sm:$0xff]
                  %310 = vst [vmem:[%s308] sm:$0xff] %v309
                  %v311 = vld [vmem:[%s307 + $0x10] sm:$0xff]
                  %312 = vst [vmem:[%s308 + $0x8] sm:$0xff] %v311
                  %v313 = vld [vmem:[%s307 + $0x20] sm:$0xff]
                  %314 = vst [vmem:[%s308 + $0x10] sm:$0xff] %v313
                  %v315 = vld [vmem:[%s307 + $0x30] sm:$0xff]
                  %316 = vst [vmem:[%s308 + $0x18] sm:$0xff] %v315
                  %v317 = vld [vmem:[%s307 + $0x40] sm:$0xff]
                  %318 = vst [vmem:[%s308 + $0x20] sm:$0xff] %v317
                  %v319 = vld [vmem:[%s307 + $0x50] sm:$0xff]
                  %320 = vst [vmem:[%s308 + $0x28] sm:$0xff] %v319
                  %v321 = vld [vmem:[%s307 + $0x60] sm:$0xff]
                  %322 = vst [vmem:[%s308 + $0x30] sm:$0xff] %v321
                  %v323 = vld [vmem:[%s307 + $0x70] sm:$0xff]
                  %324 = vst [vmem:[%s308 + $0x38] sm:$0xff] %v323
                $region98: #{patch_merging2d.1} parent=92 // loop_footer
                  %s306 = sadd.s32 1, %s302
                $region99: #{patch_merging2d.1} parent=92 // loop_footer_branch
                  %301 = sbr.rel target = $region95
                $region100: #{patch_merging2d.1} parent=92 // loop_exit
                  _
              $region93: #{patch_merging2d.1} parent=77 // pred_fallthru
                _
              // Predicated region
              $region101: #{patch_merging2d.1} parent=77 // pred_check
                _
              $region102: #{patch_merging2d.1} parent=77 // pred_check_branch
                %326 = sbr.rel target = $region104
              $region103: #{patch_merging2d.1} parent=77 // pred_region
                _
              $region104: #{patch_merging2d.1} parent=77 // pred_fallthru
                _
            $region78: #{patch_merging2d.1} parent=73 // pred_fallthru
              _
            // Predicated region
            $region79: #{patch_merging2d.1} parent=73 // pred_check
              _
            $region80: #{patch_merging2d.1} parent=73 // pred_check_branch
              %272 = sbr.rel target = $region82
            $region81: #{patch_merging2d.1} parent=73 // pred_region
              %s274 = ssub.s32 256, 1
              loop: start=0, step=1, limit=1
              $region83: #{patch_merging2d.1} parent=81 // loop_pre_header
                _
              $region84: #{patch_merging2d.1} parent=81 // loop_header
                %s276 = sphi 0, %s280
                %p277 = scmp.ge.s32.totalorder %s276, 1
                %s281 = sphi %s266, %s266
                %s282 = sphi %s261, %s261
              $region85: #{patch_merging2d.1} parent=81 // loop_header_branch
                %279 = sbr.rel (%p277) target = $region89
              $region86: #{patch_merging2d.1} parent=81 // loop_body
                %v283 = vld [vmem:[%s281] sm:%s274]
                %284 = vst [vmem:[%s282] sm:%s274] %v283
                %v285 = vld [vmem:[%s281 + $0x10] sm:%s274]
                %286 = vst [vmem:[%s282 + $0x8] sm:%s274] %v285
                %v287 = vld [vmem:[%s281 + $0x20] sm:%s274]
                %288 = vst [vmem:[%s282 + $0x10] sm:%s274] %v287
                %v289 = vld [vmem:[%s281 + $0x30] sm:%s274]
                %290 = vst [vmem:[%s282 + $0x18] sm:%s274] %v289
                %v291 = vld [vmem:[%s281 + $0x40] sm:%s274]
                %292 = vst [vmem:[%s282 + $0x20] sm:%s274] %v291
                %v293 = vld [vmem:[%s281 + $0x50] sm:%s274]
                %294 = vst [vmem:[%s282 + $0x28] sm:%s274] %v293
                %v295 = vld [vmem:[%s281 + $0x60] sm:%s274]
                %296 = vst [vmem:[%s282 + $0x30] sm:%s274] %v295
                %v297 = vld [vmem:[%s281 + $0x70] sm:%s274]
                %298 = vst [vmem:[%s282 + $0x38] sm:%s274] %v297
              $region87: #{patch_merging2d.1} parent=81 // loop_footer
                %s280 = sadd.s32 1, %s276
              $region88: #{patch_merging2d.1} parent=81 // loop_footer_branch
                %275 = sbr.rel target = $region84
              $region89: #{patch_merging2d.1} parent=81 // loop_exit
                _
            $region82: #{patch_merging2d.1} parent=73 // pred_fallthru
              _
          $region74: #{patch_merging2d.1} parent=69 // pred_fallthru
            _
          %327 = vnop
        $region70: #{patch_merging2d.1} parent=27 // pred_fallthru
          _
      $region28: #{patch_merging2d.1} parent=5 // pred_fallthru
        _
      %p328 = scmp.le.s32.totalorder 1, %s14
      %p329 = scmp.lt.s32.totalorder %s14, 3
      %p330 = pnand %p328, %p329
      %p331 = pneg %p330
      // Predicated region
      $region105: #{patch_merging2d.1} parent=5 // pred_check
        _
      $region106: #{patch_merging2d.1} parent=5 // pred_check_branch
        %333 = sbr.rel (%p330) target = $region108
      $region107: #{patch_merging2d.1} parent=5 // pred_region
        %s334 = ssub.s32 %s14, 1
        %s335 = sand.u32 %s27, 1
        %s336 = sand.u32 %s27, 1
        %s337 = smul.addr %s336, 64
        %s338 = scalar_lea.vmem [#allocation2], %s337
        // Predicated region
        $region109: #{patch_merging2d.1} parent=107 // pred_check
          %p339 = pneg %p40
        $region110: #{patch_merging2d.1} parent=107 // pred_check_branch
          %341 = sbr.rel (%p339) target = $region112
        $region111: #{patch_merging2d.1} parent=107 // pred_region
          _
        $region112: #{patch_merging2d.1} parent=107 // pred_fallthru
          _
        %s342 = sand.u32 %s53, 1
        %s343 = sand.u32 %s53, 1
        %s344 = smul.addr %s343, 64
        %s345 = scalar_lea.vmem [#allocation3], %s344
        // Predicated region
        $region113: #{patch_merging2d.1} parent=107 // pred_check
          %p346 = pneg %p66
        $region114: #{patch_merging2d.1} parent=107 // pred_check_branch
          %348 = sbr.rel (%p346) target = $region116
        $region115: #{patch_merging2d.1} parent=107 // pred_region
          _
        $region116: #{patch_merging2d.1} parent=107 // pred_fallthru
          _
        %s349 = sand.u32 %s27, 1
        %s350 = sand.u32 %s27, 1
        %s351 = smul.addr %s350, 64
        %s352 = scalar_lea.vmem [#allocation2], %s351
        %p353 = pneg %p40
        %p354 = pneg %p37
        %s355 = sand.u32 %s53, 1
        %s356 = sand.u32 %s53, 1
        %s357 = smul.addr %s356, 64
        %s358 = scalar_lea.vmem [#allocation3], %s357
        %p359 = pneg %p66
        %p360 = pneg %p63
        %p361 = pneg %p87
        %p362 = pneg %p84
        %p363 = pneg %p108
        %p364 = pneg %p105
        %p365 = pneg %p129
        %p366 = pneg %p126
        %p367 = pneg %p155
        %p368 = pneg %p152
        %s369 = sand.u32 %s142, 1
        %s370 = scalar_lea.sflag [#allocation5], %s369
        %s371 = sand.u32 %s142, 1
        %s372 = smul.addr %s371, 64
        %s373 = scalar_lea.vmem [#allocation4], %s372
        %s374 = smul.u32 8, %s19
        %s375 = smul.u32 8, %s19
        %s376 = smul.u32 8, %s19
        %v377 = vld [vmem:[%s338] sm:$0xff]
        %v378 = vld [vmem:[%s338 + $0x8] sm:$0xff]
        %v379 = vld [vmem:[%s338 + $0x10] sm:$0xff]
        %v380 = vld [vmem:[%s338 + $0x18] sm:$0xff]
        %v381 = vld [vmem:[%s338 + $0x20] sm:$0xff]
        %v382 = vld [vmem:[%s338 + $0x28] sm:$0xff]
        %v383 = vld [vmem:[%s338 + $0x30] sm:$0xff]
        %v384 = vld [vmem:[%s338 + $0x38] sm:$0xff]
        %v385 = vld [vmem:[%s345] sm:$0xff]
        %v386 = vld [vmem:[%s345 + $0x8] sm:$0xff]
        %v387 = vld [vmem:[%s345 + $0x10] sm:$0xff]
        %v388 = vld [vmem:[%s345 + $0x18] sm:$0xff]
        %v389 = vld [vmem:[%s345 + $0x20] sm:$0xff]
        %v390 = vld [vmem:[%s345 + $0x28] sm:$0xff]
        %v391 = vld [vmem:[%s345 + $0x30] sm:$0xff]
        %v392 = vld [vmem:[%s345 + $0x38] sm:$0xff]
        %vm393 = vcmask 64512
        %v394 = vsel %vm393, %v377, 0.0
        %395 = vadd.xlane.f32.xlu0 %v394
        %v396 = vpop.xlane.xlu0 %395
        %v397 = vsel %vm393, %v378, 0.0
        %398 = vadd.xlane.f32.xlu0 %v397
        %v399 = vpop.xlane.xlu0 %398
        %v400 = vsel %vm393, %v379, 0.0
        %401 = vadd.xlane.f32.xlu0 %v400
        %v402 = vpop.xlane.xlu0 %401
        %v403 = vsel %vm393, %v380, 0.0
        %404 = vadd.xlane.f32.xlu0 %v403
        %v405 = vpop.xlane.xlu0 %404
        %v406 = vsel %vm393, %v381, 0.0
        %407 = vadd.xlane.f32.xlu0 %v406
        %v408 = vpop.xlane.xlu0 %407
        %v409 = vsel %vm393, %v382, 0.0
        %410 = vadd.xlane.f32.xlu0 %v409
        %v411 = vpop.xlane.xlu0 %410
        %v412 = vsel %vm393, %v383, 0.0
        %413 = vadd.xlane.f32.xlu0 %v412
        %v414 = vpop.xlane.xlu0 %413
        %v415 = vsel %vm393, %v384, 0.0
        %416 = vadd.xlane.f32.xlu0 %v415
        %v417 = vpop.xlane.xlu0 %416
        %v418 = vsel %vm393, %v385, 0.0
        %419 = vadd.xlane.f32.xlu0 %v418
        %v420 = vpop.xlane.xlu0 %419
        %v421 = vsel %vm393, %v386, 0.0
        %422 = vadd.xlane.f32.xlu0 %v421
        %v423 = vpop.xlane.xlu0 %422
        %v424 = vsel %vm393, %v387, 0.0
        %425 = vadd.xlane.f32.xlu0 %v424
        %v426 = vpop.xlane.xlu0 %425
        %v427 = vsel %vm393, %v388, 0.0
        %428 = vadd.xlane.f32.xlu0 %v427
        %v429 = vpop.xlane.xlu0 %428
        %v430 = vsel %vm393, %v389, 0.0
        %431 = vadd.xlane.f32.xlu0 %v430
        %v432 = vpop.xlane.xlu0 %431
        %v433 = vsel %vm393, %v390, 0.0
        %434 = vadd.xlane.f32.xlu0 %v433
        %v435 = vpop.xlane.xlu0 %434
        %v436 = vsel %vm393, %v391, 0.0
        %437 = vadd.xlane.f32.xlu0 %v436
        %v438 = vpop.xlane.xlu0 %437
        %v439 = vsel %vm393, %v392, 0.0
        %440 = vadd.xlane.f32.xlu0 %v439
        %v441 = vpop.xlane.xlu0 %440
        %v442 = vadd.f32 %v396, %v420
        %v443 = vadd.f32 %v399, %v423
        %v444 = vadd.f32 %v402, %v426
        %v445 = vadd.f32 %v405, %v429
        %v446 = vadd.f32 %v408, %v432
        %v447 = vadd.f32 %v411, %v435
        %v448 = vadd.f32 %v414, %v438
        %v449 = vadd.f32 %v417, %v441
        %v450 = vmul.f32 %v377, %v377
        %v451 = vmul.f32 %v378, %v378
        %v452 = vmul.f32 %v379, %v379
        %v453 = vmul.f32 %v380, %v380
        %v454 = vmul.f32 %v381, %v381
        %v455 = vmul.f32 %v382, %v382
        %v456 = vmul.f32 %v383, %v383
        %v457 = vmul.f32 %v384, %v384
        %v458 = vsel %vm393, %v450, 0.0
        %459 = vadd.xlane.f32.xlu0 %v458
        %v460 = vpop.xlane.xlu0 %459
        %v461 = vsel %vm393, %v451, 0.0
        %462 = vadd.xlane.f32.xlu0 %v461
        %v463 = vpop.xlane.xlu0 %462
        %v464 = vsel %vm393, %v452, 0.0
        %465 = vadd.xlane.f32.xlu0 %v464
        %v466 = vpop.xlane.xlu0 %465
        %v467 = vsel %vm393, %v453, 0.0
        %468 = vadd.xlane.f32.xlu0 %v467
        %v469 = vpop.xlane.xlu0 %468
        %v470 = vsel %vm393, %v454, 0.0
        %471 = vadd.xlane.f32.xlu0 %v470
        %v472 = vpop.xlane.xlu0 %471
        %v473 = vsel %vm393, %v455, 0.0
        %474 = vadd.xlane.f32.xlu0 %v473
        %v475 = vpop.xlane.xlu0 %474
        %v476 = vsel %vm393, %v456, 0.0
        %477 = vadd.xlane.f32.xlu0 %v476
        %v478 = vpop.xlane.xlu0 %477
        %v479 = vsel %vm393, %v457, 0.0
        %480 = vadd.xlane.f32.xlu0 %v479
        %v481 = vpop.xlane.xlu0 %480
        %v482 = vmul.f32 %v385, %v385
        %v483 = vmul.f32 %v386, %v386
        %v484 = vmul.f32 %v387, %v387
        %v485 = vmul.f32 %v388, %v388
        %v486 = vmul.f32 %v389, %v389
        %v487 = vmul.f32 %v390, %v390
        %v488 = vmul.f32 %v391, %v391
        %v489 = vmul.f32 %v392, %v392
        %v490 = vsel %vm393, %v482, 0.0
        %491 = vadd.xlane.f32.xlu0 %v490
        %v492 = vpop.xlane.xlu0 %491
        %v493 = vsel %vm393, %v483, 0.0
        %494 = vadd.xlane.f32.xlu0 %v493
        %v495 = vpop.xlane.xlu0 %494
        %v496 = vsel %vm393, %v484, 0.0
        %497 = vadd.xlane.f32.xlu0 %v496
        %v498 = vpop.xlane.xlu0 %497
        %v499 = vsel %vm393, %v485, 0.0
        %500 = vadd.xlane.f32.xlu0 %v499
        %v501 = vpop.xlane.xlu0 %500
        %v502 = vsel %vm393, %v486, 0.0
        %503 = vadd.xlane.f32.xlu0 %v502
        %v504 = vpop.xlane.xlu0 %503
        %v505 = vsel %vm393, %v487, 0.0
        %506 = vadd.xlane.f32.xlu0 %v505
        %v507 = vpop.xlane.xlu0 %506
        %v508 = vsel %vm393, %v488, 0.0
        %509 = vadd.xlane.f32.xlu0 %v508
        %v510 = vpop.xlane.xlu0 %509
        %v511 = vsel %vm393, %v489, 0.0
        %512 = vadd.xlane.f32.xlu0 %v511
        %v513 = vpop.xlane.xlu0 %512
        %v514 = vadd.f32 %v460, %v492
        %v515 = vadd.f32 %v463, %v495
        %v516 = vadd.f32 %v466, %v498
        %v517 = vadd.f32 %v469, %v501
        %v518 = vadd.f32 %v472, %v504
        %v519 = vadd.f32 %v475, %v507
        %v520 = vadd.f32 %v478, %v510
        %v521 = vadd.f32 %v481, %v513
        %v522 = vmul.f32 %v442, 0.0625
        %v523 = vmul.f32 %v443, 0.0625
        %v524 = vmul.f32 %v444, 0.0625
        %v525 = vmul.f32 %v445, 0.0625
        %v526 = vmul.f32 %v446, 0.0625
        %v527 = vmul.f32 %v447, 0.0625
        %v528 = vmul.f32 %v448, 0.0625
        %v529 = vmul.f32 %v449, 0.0625
        %v530 = vmul.f32 %v514, 0.0625
        %v531 = vmul.f32 %v515, 0.0625
        %v532 = vmul.f32 %v516, 0.0625
        %v533 = vmul.f32 %v517, 0.0625
        %v534 = vmul.f32 %v518, 0.0625
        %v535 = vmul.f32 %v519, 0.0625
        %v536 = vmul.f32 %v520, 0.0625
        %v537 = vmul.f32 %v521, 0.0625
        %v538 = vmul.f32 %v522, %v522
        %v539 = vmul.f32 %v523, %v523
        %v540 = vmul.f32 %v524, %v524
        %v541 = vmul.f32 %v525, %v525
        %v542 = vmul.f32 %v526, %v526
        %v543 = vmul.f32 %v527, %v527
        %v544 = vmul.f32 %v528, %v528
        %v545 = vmul.f32 %v529, %v529
        %v546 = vsub.f32 %v530, %v538
        %v547 = vsub.f32 %v531, %v539
        %v548 = vsub.f32 %v532, %v540
        %v549 = vsub.f32 %v533, %v541
        %v550 = vsub.f32 %v534, %v542
        %v551 = vsub.f32 %v535, %v543
        %v552 = vsub.f32 %v536, %v544
        %v553 = vsub.f32 %v537, %v545
        %v554 = vmax.f32 %v546, 0.0
        %v555 = vmax.f32 %v547, 0.0
        %v556 = vmax.f32 %v548, 0.0
        %v557 = vmax.f32 %v549, 0.0
        %v558 = vmax.f32 %v550, 0.0
        %v559 = vmax.f32 %v551, 0.0
        %v560 = vmax.f32 %v552, 0.0
        %v561 = vmax.f32 %v553, 0.0
        %v562 = vadd.f32 %v554, 1e-05
        %v563 = vadd.f32 %v555, 1e-05
        %v564 = vadd.f32 %v556, 1e-05
        %v565 = vadd.f32 %v557, 1e-05
        %v566 = vadd.f32 %v558, 1e-05
        %v567 = vadd.f32 %v559, 1e-05
        %v568 = vadd.f32 %v560, 1e-05
        %v569 = vadd.f32 %v561, 1e-05
        %v570 = vrsqrt.pop %v562
        %v571 = vrsqrt.pop %v563
        %v572 = vrsqrt.pop %v564
        %v573 = vrsqrt.pop %v565
        %v574 = vrsqrt.pop %v566
        %v575 = vrsqrt.pop %v567
        %v576 = vrsqrt.pop %v568
        %v577 = vrsqrt.pop %v569
        %v578 = vsub.f32 %v377, %v522
        %v579 = vsub.f32 %v378, %v523
        %v580 = vsub.f32 %v379, %v524
        %v581 = vsub.f32 %v380, %v525
        %v582 = vsub.f32 %v381, %v526
        %v583 = vsub.f32 %v382, %v527
        %v584 = vsub.f32 %v383, %v528
        %v585 = vsub.f32 %v384, %v529
        %v586 = vmul.f32 %v578, %v570
        %v587 = vmul.f32 %v579, %v571
        %v588 = vmul.f32 %v580, %v572
        %v589 = vmul.f32 %v581, %v573
        %v590 = vmul.f32 %v582, %v574
        %v591 = vmul.f32 %v583, %v575
        %v592 = vmul.f32 %v584, %v576
        %v593 = vmul.f32 %v585, %v577
        %v594 = vsub.f32 %v385, %v522
        %v595 = vsub.f32 %v386, %v523
        %v596 = vsub.f32 %v387, %v524
        %v597 = vsub.f32 %v388, %v525
        %v598 = vsub.f32 %v389, %v526
        %v599 = vsub.f32 %v390, %v527
        %v600 = vsub.f32 %v391, %v528
        %v601 = vsub.f32 %v392, %v529
        %v602 = vmul.f32 %v594, %v570
        %v603 = vmul.f32 %v595, %v571
        %v604 = vmul.f32 %v596, %v572
        %v605 = vmul.f32 %v597, %v573
        %v606 = vmul.f32 %v598, %v574
        %v607 = vmul.f32 %v599, %v575
        %v608 = vmul.f32 %v600, %v576
        %v609 = vmul.f32 %v601, %v577
        %v610 = vld [vmem:[%s2] sm:$0xff]
        %v611 = vld [vmem:[%s3] sm:$0xff]
        %v613 = vsel %vm393, %v602, 0
        %v616 = vsel %vm393, %v603, 0
        %v619 = vsel %vm393, %v604, 0
        %v622 = vsel %vm393, %v605, 0
        %v625 = vsel %vm393, %v606, 0
        %v628 = vsel %vm393, %v607, 0
        %v631 = vsel %vm393, %v608, 0
        %v634 = vsel %vm393, %v609, 0
        %636 = vmatprep.subr.mxu0 0.0
        %637 = vmatpush1.msra.mxu0 0.0
        %638 = vmatprep.subr.mxu0 0.0
        %639 = vmatpush1.msra.mxu0 0.0
        %640 = vmatprep.subr.mxu0 0.0
        %641 = vmatpush1.msra.mxu0 0.0
        %642 = vmatprep.subr.mxu0 0.0
        %643 = vmatpush1.msra.mxu0 0.0
        %644 = vmatprep.subr.mxu0 0.0
        %645 = vmatpush1.msra.mxu0 0.0
        %646 = vmatprep.subr.mxu0 0.0
        %647 = vmatpush1.msra.mxu0 0.0
        %648 = vmatprep.subr.mxu0 0.0
        %649 = vmatpush1.msra.mxu0 0.0
        %650 = vmatprep.subr.mxu0 0.0
        %651 = vmatpush1.msra.mxu0 0.0
        %652 = vmatprep.subr.mxu0 0.0
        %653 = vmatpush1.msra.mxu0 0.0
        %654 = vmatprep.subr.mxu0 0.0
        %655 = vmatpush1.msra.mxu0 0.0
        %656 = vmatprep.subr.mxu0 0.0
        %657 = vmatpush1.msra.mxu0 0.0
        %658 = vmatprep.subr.mxu0 0.0
        %659 = vmatpush1.msra.mxu0 0.0
        %660 = vmatprep.subr.mxu0 0.0
        %661 = vmatpush1.msra.mxu0 0.0
        %662 = vmatprep.subr.mxu0 0.0
        %663 = vmatpush1.msra.mxu0 0.0
        %664 = vmatprep.subr.mxu0 0.0
        %665 = vmatpush1.msra.mxu0 0.0
        %666 = vmatprep.subr.mxu0 0.0
        %667 = vmatpush1.msra.mxu0 %v611
        %668 = vmatprep.subr.mxu0 0.0
        %669 = vmatpush2.msra.mxu0 0.0
        %670 = vmatprep.subr.mxu0 0.0
        %671 = vmatpush2.msra.mxu0 0.0
        %672 = vmatprep.subr.mxu0 0.0
        %673 = vmatpush2.msra.mxu0 0.0
        %674 = vmatprep.subr.mxu0 0.0
        %675 = vmatpush2.msra.mxu0 0.0
        %676 = vmatprep.subr.mxu0 0.0
        %677 = vmatpush2.msra.mxu0 0.0
        %678 = vmatprep.subr.mxu0 0.0
        %679 = vmatpush2.msra.mxu0 0.0
        %680 = vmatprep.subr.mxu0 0.0
        %681 = vmatpush2.msra.mxu0 0.0
        %682 = vmatprep.subr.mxu0 0.0
        %683 = vmatpush2.msra.mxu0 0.0
        %684 = vmatprep.subr.mxu0 0.0
        %685 = vmatpush2.msra.mxu0 0.0
        %686 = vmatprep.subr.mxu0 0.0
        %687 = vmatpush2.msra.mxu0 0.0
        %688 = vmatprep.subr.mxu0 0.0
        %689 = vmatpush2.msra.mxu0 0.0
        %690 = vmatprep.subr.mxu0 0.0
        %691 = vmatpush2.msra.mxu0 0.0
        %692 = vmatprep.subr.mxu0 0.0
        %693 = vmatpush2.msra.mxu0 0.0
        %694 = vmatprep.subr.mxu0 0.0
        %695 = vmatpush2.msra.mxu0 0.0
        %696 = vmatprep.subr.mxu0 0.0
        %697 = vmatpush2.msra.mxu0 0.0
        %698 = vmatprep.subr.mxu0 0.0
        %699 = vmatpush2.msra.mxu0 0.0
        %700 = vmatprep.mubr.f32.mxu0 0.0
        %701 = vmatmul.mubr.f32.gmra.mxu0 %v613
        %v702 = vpop.f32.mrf.mxu0
        %v703 = vadd.f32 0.0, %v702
        %v704 = vpop.f32.mrf.mxu0
        %705 = vmatprep.mubr.f32.mxu0 0.0
        %706 = vmatmul.mubr.f32.gmra.mxu0 %v616
        %v707 = vpop.f32.mrf.mxu0
        %v708 = vadd.f32 0.0, %v707
        %v709 = vpop.f32.mrf.mxu0
        %710 = vmatprep.mubr.f32.mxu0 0.0
        %711 = vmatmul.mubr.f32.gmra.mxu0 %v619
        %v712 = vpop.f32.mrf.mxu0
        %v713 = vadd.f32 0.0, %v712
        %v714 = vpop.f32.mrf.mxu0
        %715 = vmatprep.mubr.f32.mxu0 0.0
        %716 = vmatmul.mubr.f32.gmra.mxu0 %v622
        %v717 = vpop.f32.mrf.mxu0
        %v718 = vadd.f32 0.0, %v717
        %v719 = vpop.f32.mrf.mxu0
        %720 = vmatprep.mubr.f32.mxu0 0.0
        %721 = vmatmul.mubr.f32.gmra.mxu0 %v625
        %v722 = vpop.f32.mrf.mxu0
        %v723 = vadd.f32 0.0, %v722
        %v724 = vpop.f32.mrf.mxu0
        %725 = vmatprep.mubr.f32.mxu0 0.0
        %726 = vmatmul.mubr.f32.gmra.mxu0 %v628
        %v727 = vpop.f32.mrf.mxu0
        %v728 = vadd.f32 0.0, %v727
        %v729 = vpop.f32.mrf.mxu0
        %730 = vmatprep.mubr.f32.mxu0 0.0
        %731 = vmatmul.mubr.f32.gmra.mxu0 %v631
        %v732 = vpop.f32.mrf.mxu0
        %v733 = vadd.f32 0.0, %v732
        %v734 = vpop.f32.mrf.mxu0
        %735 = vmatprep.mubr.f32.mxu0 0.0
        %736 = vmatmul.mubr.f32.gmra.mxu0 %v634
        %v737 = vpop.f32.mrf.mxu0
        %v738 = vadd.f32 0.0, %v737
        %v739 = vpop.f32.mrf.mxu0
        %740 = vdwg.mxu0
        %v742 = vsel %vm393, %v586, 0
        %v745 = vsel %vm393, %v587, 0
        %v748 = vsel %vm393, %v588, 0
        %v751 = vsel %vm393, %v589, 0
        %v754 = vsel %vm393, %v590, 0
        %v757 = vsel %vm393, %v591, 0
        %v760 = vsel %vm393, %v592, 0
        %v763 = vsel %vm393, %v593, 0
        %765 = vmatprep.subr.mxu0 0.0
        %766 = vmatpush1.msra.mxu0 0.0
        %767 = vmatprep.subr.mxu0 0.0
        %768 = vmatpush1.msra.mxu0 0.0
        %769 = vmatprep.subr.mxu0 0.0
        %770 = vmatpush1.msra.mxu0 0.0
        %771 = vmatprep.subr.mxu0 0.0
        %772 = vmatpush1.msra.mxu0 0.0
        %773 = vmatprep.subr.mxu0 0.0
        %774 = vmatpush1.msra.mxu0 0.0
        %775 = vmatprep.subr.mxu0 0.0
        %776 = vmatpush1.msra.mxu0 0.0
        %777 = vmatprep.subr.mxu0 0.0
        %778 = vmatpush1.msra.mxu0 0.0
        %779 = vmatprep.subr.mxu0 0.0
        %780 = vmatpush1.msra.mxu0 0.0
        %781 = vmatprep.subr.mxu0 0.0
        %782 = vmatpush1.msra.mxu0 0.0
        %783 = vmatprep.subr.mxu0 0.0
        %784 = vmatpush1.msra.mxu0 0.0
        %785 = vmatprep.subr.mxu0 0.0
        %786 = vmatpush1.msra.mxu0 0.0
        %787 = vmatprep.subr.mxu0 0.0
        %788 = vmatpush1.msra.mxu0 0.0
        %789 = vmatprep.subr.mxu0 0.0
        %790 = vmatpush1.msra.mxu0 0.0
        %791 = vmatprep.subr.mxu0 0.0
        %792 = vmatpush1.msra.mxu0 0.0
        %793 = vmatprep.subr.mxu0 0.0
        %794 = vmatpush1.msra.mxu0 0.0
        %795 = vmatprep.subr.mxu0 0.0
        %796 = vmatpush1.msra.mxu0 %v610
        %797 = vmatprep.subr.mxu0 0.0
        %798 = vmatpush2.msra.mxu0 0.0
        %799 = vmatprep.subr.mxu0 0.0
        %800 = vmatpush2.msra.mxu0 0.0
        %801 = vmatprep.subr.mxu0 0.0
        %802 = vmatpush2.msra.mxu0 0.0
        %803 = vmatprep.subr.mxu0 0.0
        %804 = vmatpush2.msra.mxu0 0.0
        %805 = vmatprep.subr.mxu0 0.0
        %806 = vmatpush2.msra.mxu0 0.0
        %807 = vmatprep.subr.mxu0 0.0
        %808 = vmatpush2.msra.mxu0 0.0
        %809 = vmatprep.subr.mxu0 0.0
        %810 = vmatpush2.msra.mxu0 0.0
        %811 = vmatprep.subr.mxu0 0.0
        %812 = vmatpush2.msra.mxu0 0.0
        %813 = vmatprep.subr.mxu0 0.0
        %814 = vmatpush2.msra.mxu0 0.0
        %815 = vmatprep.subr.mxu0 0.0
        %816 = vmatpush2.msra.mxu0 0.0
        %817 = vmatprep.subr.mxu0 0.0
        %818 = vmatpush2.msra.mxu0 0.0
        %819 = vmatprep.subr.mxu0 0.0
        %820 = vmatpush2.msra.mxu0 0.0
        %821 = vmatprep.subr.mxu0 0.0
        %822 = vmatpush2.msra.mxu0 0.0
        %823 = vmatprep.subr.mxu0 0.0
        %824 = vmatpush2.msra.mxu0 0.0
        %825 = vmatprep.subr.mxu0 0.0
        %826 = vmatpush2.msra.mxu0 0.0
        %827 = vmatprep.subr.mxu0 0.0
        %828 = vmatpush2.msra.mxu0 0.0
        %829 = vmatprep.mubr.f32.mxu0 0.0
        %830 = vmatmul.mubr.f32.gmra.mxu0 %v742
        %v831 = vpop.f32.mrf.mxu0
        %v832 = vadd.f32 %v703, %v831
        %v833 = vpop.f32.mrf.mxu0
        %834 = vmatprep.mubr.f32.mxu0 0.0
        %835 = vmatmul.mubr.f32.gmra.mxu0 %v745
        %v836 = vpop.f32.mrf.mxu0
        %v837 = vadd.f32 %v708, %v836
        %v838 = vpop.f32.mrf.mxu0
        %839 = vmatprep.mubr.f32.mxu0 0.0
        %840 = vmatmul.mubr.f32.gmra.mxu0 %v748
        %v841 = vpop.f32.mrf.mxu0
        %v842 = vadd.f32 %v713, %v841
        %v843 = vpop.f32.mrf.mxu0
        %844 = vmatprep.mubr.f32.mxu0 0.0
        %845 = vmatmul.mubr.f32.gmra.mxu0 %v751
        %v846 = vpop.f32.mrf.mxu0
        %v847 = vadd.f32 %v718, %v846
        %v848 = vpop.f32.mrf.mxu0
        %849 = vmatprep.mubr.f32.mxu0 0.0
        %850 = vmatmul.mubr.f32.gmra.mxu0 %v754
        %v851 = vpop.f32.mrf.mxu0
        %v852 = vadd.f32 %v723, %v851
        %v853 = vpop.f32.mrf.mxu0
        %854 = vmatprep.mubr.f32.mxu0 0.0
        %855 = vmatmul.mubr.f32.gmra.mxu0 %v757
        %v856 = vpop.f32.mrf.mxu0
        %v857 = vadd.f32 %v728, %v856
        %v858 = vpop.f32.mrf.mxu0
        %859 = vmatprep.mubr.f32.mxu0 0.0
        %860 = vmatmul.mubr.f32.gmra.mxu0 %v760
        %v861 = vpop.f32.mrf.mxu0
        %v862 = vadd.f32 %v733, %v861
        %v863 = vpop.f32.mrf.mxu0
        %864 = vmatprep.mubr.f32.mxu0 0.0
        %865 = vmatmul.mubr.f32.gmra.mxu0 %v763
        %v866 = vpop.f32.mrf.mxu0
        %v867 = vadd.f32 %v738, %v866
        %v868 = vpop.f32.mrf.mxu0
        %869 = vdwg.mxu0
        %v870 = vld [vmem:[%s4] sm:$0x1]
        %v872 = vlaneseq
        %v873 = vshrl.u32 %v872, 7
        %v874 = vsub.s32 0, %v873
        %v875 = vrot.slane %v870, %v874
        %v877 = vadd.f32 %v832, %v875
        %v878 = vadd.f32 %v837, %v875
        %v879 = vadd.f32 %v842, %v875
        %v880 = vadd.f32 %v847, %v875
        %v881 = vadd.f32 %v852, %v875
        %v882 = vadd.f32 %v857, %v875
        %v883 = vadd.f32 %v862, %v875
        %v884 = vadd.f32 %v867, %v875
        %885 = vst.msk [vmem:[%s373] sm:$0xff] %vm393, %v877
        %886 = vst.msk [vmem:[%s373 + $0x8] sm:$0xff] %vm393, %v878
        %887 = vst.msk [vmem:[%s373 + $0x10] sm:$0xff] %vm393, %v879
        %888 = vst.msk [vmem:[%s373 + $0x18] sm:$0xff] %vm393, %v880
        %889 = vst.msk [vmem:[%s373 + $0x20] sm:$0xff] %vm393, %v881
        %890 = vst.msk [vmem:[%s373 + $0x28] sm:$0xff] %vm393, %v882
        %891 = vst.msk [vmem:[%s373 + $0x30] sm:$0xff] %vm393, %v883
        %892 = vst.msk [vmem:[%s373 + $0x38] sm:$0xff] %vm393, %v884
        %s893 = sand.u32 %s142, 1
        %s894 = scalar_lea.sflag [#allocation5], %s893
        %s895 = sand.u32 %s142, 1
        %s896 = smul.addr %s895, 64
        %s897 = scalar_lea.vmem [#allocation4], %s896
        // Predicated region
        $region117: #{patch_merging2d.1} parent=107 // pred_check
          %p898 = pneg %p152
        $region118: #{patch_merging2d.1} parent=107 // pred_check_branch
          %900 = sbr.rel (%p898) target = $region120
        $region119: #{patch_merging2d.1} parent=107 // pred_region
          %s901 = smul.u32 8, %s19
          %s903 = ssub.s32 1024, 1024
          %904 = vsyncadd %s894, %s903
          %s905 = smul.addr %s901, 128
          %s906 = scalar_lea.hbm %s5, %s905
          %s907 = sshll.u32 %s897, 4
          %s908 = int_to_ptr.vmem [resolvable:$true] %s907
          %913 = dma.vmem_to_hbm [thread:$0]  %s908, 1024, %s906, %s894, 128, 128, 8
        $region120: #{patch_merging2d.1} parent=107 // pred_fallthru
          _
      $region108: #{patch_merging2d.1} parent=5 // pred_fallthru
        _
      %p914 = scmp.le.s32.totalorder 2, %s14
      // Predicated region
      $region121: #{patch_merging2d.1} parent=5 // pred_check
        %p915 = pneg %p914
      $region122: #{patch_merging2d.1} parent=5 // pred_check_branch
        %917 = sbr.rel (%p915) target = $region124
      $region123: #{patch_merging2d.1} parent=5 // pred_region
        %s918 = ssub.s32 %s14, 2
        // Predicated region
        $region125: #{patch_merging2d.1} parent=123 // pred_check
          %p919 = pneg %p158
        $region126: #{patch_merging2d.1} parent=123 // pred_check_branch
          %921 = sbr.rel (%p919) target = $region128
        $region127: #{patch_merging2d.1} parent=123 // pred_region
          %s922 = sand.u32 %s143, 1
          %s923 = scalar_lea.sflag [#allocation5], %s922
          %s924 = sand.u32 %s143, 1
          %s925 = smul.addr %s924, 64
          %s926 = scalar_lea.vmem [#allocation4], %s925
          %927 = dma.done %s923, 1024
        $region128: #{patch_merging2d.1} parent=123 // pred_fallthru
          _
      $region124: #{patch_merging2d.1} parent=5 // pred_fallthru
        _
    $region6: #{patch_merging2d.1} parent=1 // loop_footer
      %s18 = sadd.s32 1, %s14
    $region7: #{patch_merging2d.1} parent=1 // loop_footer_branch
      %13 = sbr.rel target = $region3
    $region8: #{patch_merging2d.1} parent=1 // loop_exit
      _
    %928 = vsyncpa [#allocation5], 1
    %s929 = scalar_lea.sflag [#allocation5], 1
    %930 = vsyncpa %s929, 1

</llo_original>
